<compile_context>
chip_gen: v5e
topology: v5e:2x2
jax: 0.10.0
libtpu: 0.0.40
codegen_flags: <defaults>
</compile_context>

<pallas_src>
import functools

import jax
import jax.numpy as jnp
import numpy as np
from jax import lax
from jax.experimental import pallas as pl
from jax.experimental.pallas import tpu as pltpu

LN_EPS = 1e-5


# ----------------------------- kernels -------------------------------------


def _qkv_kernel(x_ref, w_ref, b_ref, o_ref):
    # x: (tm, D), w: (D, 3D), b: (1, 3D)  ->  o: (tm, 3D)
    o_ref[...] = (
        jnp.dot(x_ref[...], w_ref[...], preferred_element_type=jnp.float32)
        + b_ref[...]
    )


def _mha_kernel(q_ref, k_ref, v_ref, o_ref):
    # One batch element per grid step; all H heads processed together.
    # q,k,v blocks: (1, H, L, Dh).  Q arrives pre-scaled (scale folded into
    # the QKV projection weights), so this kernel is pure matmul + softmax.
    q = q_ref[0]
    k = k_ref[0]
    v = v_ref[0]
    # batched QK^T, contraction on the last dims -> no explicit transpose
    s = jnp.einsum("hqd,hkd->hqk", q, k, preferred_element_type=jnp.float32)
    s = s - jnp.max(s, axis=-1, keepdims=True)
    p = jnp.exp(s)
    p = p * pl.reciprocal(jnp.sum(p, axis=-1, keepdims=True), approx=True)
    o_ref[0] = jnp.einsum("hqk,hkd->hqd", p, v, preferred_element_type=jnp.float32)


def _layernorm(y, g, b):
    mean = jnp.mean(y, axis=-1, keepdims=True)
    var = jnp.mean((y - mean) ** 2, axis=-1, keepdims=True)
    return (y - mean) * lax.rsqrt(var + LN_EPS) * g + b


def _tail_kernel(ctx_ref, x_ref, wo_ref, bo_ref, g1_ref, be1_ref,
                 w1_ref, b1_ref, w2_ref, b2_ref, g2_ref, be2_ref, o_ref):
    # Fused: out-proj + residual + LN1 + FFN(relu) + residual + LN2,
    # applied to a (tm, D) tile of token rows.  Intermediates stay in VMEM/vregs.
    ctx = ctx_ref[...]
    x = x_ref[...]
    out = jnp.dot(ctx, wo_ref[...], preferred_element_type=jnp.float32) + bo_ref[...]
    out = out + x                       # residual (dropout = identity at p=0.0)
    out = _layernorm(out, g1_ref[...], be1_ref[...])
    h = jnp.dot(out, w1_ref[...], preferred_element_type=jnp.float32) + b1_ref[...]
    h = jnp.maximum(h, 0.0)             # relu
    y = jnp.dot(h, w2_ref[...], preferred_element_type=jnp.float32) + b2_ref[...]
    y = y + out                         # residual
    o_ref[...] = _layernorm(y, g2_ref[...], be2_ref[...])


# ----------------------------- wrappers -------------------------------------


def _row_tile(M):
    # biggest sublane-aligned row tile that evenly divides M (toy sizes);
    # gives >=2 parallel grid steps when possible (v7x dual-TC).
    return 8 if (M % 8 == 0 and M > 8) else M


def pallas_qkv(x2d, wqkv, bqkv):
    M, D = x2d.shape
    N = wqkv.shape[1]
    tm = _row_tile(M)
    return pl.pallas_call(
        _qkv_kernel,
        grid=(M // tm,),
        in_specs=[
            pl.BlockSpec((tm, D), lambda i: (i, 0)),
            pl.BlockSpec((D, N), lambda i: (0, 0)),
            pl.BlockSpec((1, N), lambda i: (0, 0)),
        ],
        out_specs=pl.BlockSpec((tm, N), lambda i: (i, 0)),
        out_shape=jax.ShapeDtypeStruct((M, N), jnp.float32),
        compiler_params=pltpu.CompilerParams(dimension_semantics=("parallel",)),
    )(x2d, wqkv, bqkv)


def pallas_mha(qh, kh, vh):
    B, H, L, Dh = qh.shape
    spec = pl.BlockSpec((1, H, L, Dh), lambda b: (b, 0, 0, 0))
    return pl.pallas_call(
        _mha_kernel,
        grid=(B,),
        in_specs=[spec, spec, spec],
        out_specs=spec,
        out_shape=jax.ShapeDtypeStruct((B, H, L, Dh), jnp.float32),
        compiler_params=pltpu.CompilerParams(dimension_semantics=("parallel",)),
    )(qh, kh, vh)


def pallas_tail(ctx2d, x2d, wo, bo, g1, be1, w1, b1, w2, b2, g2, be2):
    M, D = x2d.shape
    Hid = w1.shape[1]
    tm = _row_tile(M)
    row = pl.BlockSpec((tm, D), lambda i: (i, 0))

    def full(shape):
        return pl.BlockSpec(shape, lambda i: (0, 0))

    return pl.pallas_call(
        _tail_kernel,
        grid=(M // tm,),
        in_specs=[
            row, row,
            full((D, D)), full((1, D)), full((1, D)), full((1, D)),
            full((D, Hid)), full((1, Hid)), full((Hid, D)), full((1, D)),
            full((1, D)), full((1, D)),
        ],
        out_specs=row,
        out_shape=jax.ShapeDtypeStruct((M, D), jnp.float32),
        compiler_params=pltpu.CompilerParams(dimension_semantics=("parallel",)),
    )(ctx2d, x2d, wo, bo, g1, be1, w1, b1, w2, b2, g2, be2)


def encoder_forward(x, p):
    """Pallas implementation of Encoder.forward(x). x: (B, L, D) float32."""
    B, L, D = x.shape
    H = p["num_head"]
    Dh = D // H
    M = B * L

    x2d = x.reshape(M, D)

    # 1) fused QKV projection (one matmul, N = 3*D; Q pre-scaled via weights)
    qkv = pallas_qkv(x2d, p["wqkv"], p["bqkv"])              # (M, 3D)
    Q = qkv[:, :D]
    K = qkv[:, D:2 * D]
    V = qkv[:, 2 * D:]

    # exact equivalent of torch .view(B*H, -1, Dh) on contiguous tensors
    # (row-major reinterpretation), grouped as (B, H, L, Dh) so one grid step
    # covers all heads of a batch element.
    Qh = Q.reshape(B, H, L, Dh)
    Kh = K.reshape(B, H, L, Dh)
    Vh = V.reshape(B, H, L, Dh)

    # 2) attention, all heads per batch element
    ctx = pallas_mha(Qh, Kh, Vh)                             # (B, H, L, Dh)
    ctx2d = ctx.reshape(M, D)   # inverse of the torch .view back to (B, L, D)

    # 3) fused out-proj + residual + LN1 + FFN + residual + LN2
    out2d = pallas_tail(
        ctx2d, x2d, p["wo"], p["bo"], p["ln1_g"], p["ln1_b"],
        p["w1"], p["b1"], p["w2"], p["b2"], p["ln2_g"], p["ln2_b"],
    )
    return out2d.reshape(B, L, D)


# -------------------------- pure-JAX reference -------------------------------


def encoder_reference(x, p):
    B, L, D = x.shape
    H = p["num_head"]
    Dh = D // H
    x2d = x.reshape(B * L, D)
    Q = (x2d @ p["wq"] + p["bq"]).reshape(B * H, L, Dh)
    K = (x2d @ p["wk"] + p["bk"]).reshape(B * H, L, Dh)
    V = (x2d @ p["wv"] + p["bv"]).reshape(B * H, L, Dh)
    scale = float(Dh) ** (-0.5)
    s = jnp.einsum("bqd,bkd->bqk", Q, K) * scale
    a = jax.nn.softmax(s, axis=-1)
    ctx = jnp.einsum("bqk,bkd->bqd", a, V).reshape(B, L, D)
    out = ctx @ p["wo"] + p["bo"] + x
    mean = out.mean(-1, keepdims=True)
    var = ((out - mean) ** 2).mean(-1, keepdims=True)
    out = (out - mean) / jnp.sqrt(var + LN_EPS) * p["ln1_g"] + p["ln1_b"]
    h = jnp.maximum(out @ p["w1"] + p["b1"], 0.0)
    y = h @ p["w2"] + p["b2"] + out
    mean = y.mean(-1, keepdims=True)
    var = ((y - mean) ** 2).mean(-1, keepdims=True)
    return (y - mean) / jnp.sqrt(var + LN_EPS) * p["ln2_g"] + p["ln2_b"]


# ------------------------------ param init ----------------------------------


def init_params(key, dim_model, num_head, hidden):
    def init_linear(k, din, dout):
        k1, k2 = jax.random.split(k)
        bound = 1.0 / np.sqrt(din)
        w = jax.random.uniform(k1, (din, dout), jnp.float32, -bound, bound)
        b = jax.random.uniform(k2, (1, dout), jnp.float32, -bound, bound)
        return w, b

    keys = jax.random.split(key, 6)
    wq, bq = init_linear(keys[0], dim_model, dim_model)
    wk, bk = init_linear(keys[1], dim_model, dim_model)
    wv, bv = init_linear(keys[2], dim_model, dim_model)
    wo, bo = init_linear(keys[3], dim_model, dim_model)
    w1, b1 = init_linear(keys[4], dim_model, hidden)
    w2, b2 = init_linear(keys[5], hidden, dim_model)

    # one-time fold of the softmax scale 1/sqrt(dim_head) into the Q slice of
    # the fused projection weights (removes all scaling work from the kernels)
    dim_head = dim_model // num_head
    scale = float(dim_head) ** (-0.5)

    return {
        "num_head": num_head,
        "wq": wq, "bq": bq, "wk": wk, "bk": bk, "wv": wv, "bv": bv,
        # fused QKV weights for the single-projection kernel (Q pre-scaled)
        "wqkv": jnp.concatenate([wq * scale, wk, wv], axis=1),
        "bqkv": jnp.concatenate([bq * scale, bk, bv], axis=1),
        "wo": wo, "bo": bo,
        "ln1_g": jnp.ones((1, dim_model), jnp.float32),
        "ln1_b": jnp.zeros((1, dim_model), jnp.float32),
        "w1": w1, "b1": b1, "w2": w2, "b2": b2,
        "ln2_g": jnp.ones((1, dim_model), jnp.float32),
        "ln2_b": jnp.zeros((1, dim_model), jnp.float32),
    }


# --------------------------------- main --------------------------------------

if __name__ == "__main__":
    B, L, D, H, HID = 2, 8, 32, 4, 64  # batch, seq, dim_model, heads, ffn hidden

    key = jax.random.PRNGKey(0)
    kx, kp = jax.random.split(key)
    x = jax.random.normal(kx, (B, L, D), jnp.float32)
    params = init_params(kp, D, H, HID)

    out = encoder_forward(x, params)
    out = jax.block_until_ready(out)

    ref = encoder_reference(x, params)
    # tolerance slightly relaxed vs pure-f32 because the softmax denominator
    # uses the EUP approximate reciprocal (pl.reciprocal(approx=True)).
    np.testing.assert_allclose(np.asarray(out), np.asarray(ref), rtol=2e-3, atol=2e-3)

    print("KERNEL_OK")
</pallas_src>

<mosaic_0001>
module attributes {stable_mosaic.version = 11 : i64} {
  func.func @_qkv_kernel(%arg0: i32, %arg1: memref<8x32xf32, #tpu.memory_space<vmem>>, %arg2: memref<32x96xf32, #tpu.memory_space<vmem>>, %arg3: memref<1x96xf32, #tpu.memory_space<vmem>>, %arg4: memref<8x96xf32, #tpu.memory_space<vmem>>) attributes {dimension_semantics = [#tpu.dimension_semantics<parallel>], iteration_bounds = array<i64: 2>, scalar_prefetch = 0 : i64, scratch_operands = 0 : i64, tpu.core_type = #tpu.core_type<tc>, window_params = [{transform_indices = @transform_0, window_bounds = array<i64: 8, 32>}, {pipeline_mode = #tpu.pipeline_mode<synchronous>, transform_indices = @transform_1, window_bounds = array<i64: 32, 96>}, {pipeline_mode = #tpu.pipeline_mode<synchronous>, transform_indices = @transform_2, window_bounds = array<i64: 1, 96>}, {transform_indices = @transform_3, window_bounds = array<i64: 8, 96>}]} {
    %c0 = arith.constant 0 : index
    %c0_0 = arith.constant 0 : index
    %0 = vector.load %arg1[%c0, %c0_0] : memref<8x32xf32, #tpu.memory_space<vmem>>, vector<8x32xf32>
    %c0_1 = arith.constant 0 : index
    %c0_2 = arith.constant 0 : index
    %1 = vector.load %arg2[%c0_1, %c0_2] : memref<32x96xf32, #tpu.memory_space<vmem>>, vector<32x96xf32>
    %cst = arith.constant dense<0.000000e+00> : vector<8x96xf32>
    %2 = tpu.matmul %0, %1, %cst {dimension_numbers = #tpu.dot_dimension_numbers<[1], [0], [0], [1], [0, 0, 1, 1], [], []>} : vector<8x32xf32>, vector<32x96xf32>, vector<8x96xf32> -> vector<8x96xf32>
    %c0_3 = arith.constant 0 : index
    %c0_4 = arith.constant 0 : index
    %3 = vector.load %arg3[%c0_3, %c0_4] : memref<1x96xf32, #tpu.memory_space<vmem>>, vector<1x96xf32>
    %4 = vector.broadcast %3 : vector<1x96xf32> to vector<8x96xf32>
    %5 = arith.addf %2, %4 : vector<8x96xf32>
    %c0_5 = arith.constant 0 : index
    %c0_6 = arith.constant 0 : index
    %6 = vector.load %arg4[%c0_5, %c0_6] : memref<8x96xf32, #tpu.memory_space<vmem>>, vector<8x96xf32>
    tpu.vector_store %arg4[%c0_5, %c0_6], %5 {strides = array<i32>} : memref<8x96xf32, #tpu.memory_space<vmem>>, vector<8x96xf32>,
    return
  }
  func.func @transform_0(%arg0: i32) -> (i32, i32) {
    %c0_i32 = arith.constant 0 : i32
    %c0_i32_0 = arith.constant 0 : i32
    return %arg0, %c0_i32 : i32, i32
  }
  func.func @transform_1(%arg0: i32) -> (i32, i32) {
    %c0_i32 = arith.constant 0 : i32
    %c0_i32_0 = arith.constant 0 : i32
    %c0_i32_1 = arith.constant 0 : i32
    return %c0_i32, %c0_i32_0 : i32, i32
  }
  func.func @transform_2(%arg0: i32) -> (i32, i32) {
    %c0_i32 = arith.constant 0 : i32
    %c0_i32_0 = arith.constant 0 : i32
    %c0_i32_1 = arith.constant 0 : i32
    return %c0_i32, %c0_i32_0 : i32, i32
  }
  func.func @transform_3(%arg0: i32) -> (i32, i32) {
    %c0_i32 = arith.constant 0 : i32
    %c0_i32_0 = arith.constant 0 : i32
    return %arg0, %c0_i32 : i32, i32
  }
}

</mosaic_0001>

<llo_original>
// kernel: tpu_custom_call.1
$region0: #{tpu_custom_call.1}
  #allocation0 [shape = 'u32[]', space=smem, size = 0x4, offset = 0x4, fixed_abs, tag = 'smem constant byte address 0x4 - core index']
  #allocation1 [shape = 'u32[72,128]{1,0:T(1,128)}', space=vmem, size = 0x9000, scoped, tag = 'internal scratch']
  %s0 = inlined_call_operand.hbm [shape: f32[16,32], index: 0, kind: input, shape index: {}]
  %s1 = inlined_call_operand.hbm [shape: f32[32,96], index: 1, kind: input, shape index: {}]
  %s2 = inlined_call_operand.vmem [shape: f32[1,96], index: 2, kind: input, shape index: {}]
  %s3 = inlined_call_operand.hbm [shape: f32[16,96], index: 3, kind: output, shape index: {}]
  %s4 = sld [smem:[#allocation0]]
  $region53: #{tpu_custom_call.1} parent=0
    _
  %s6 = ssub.s32 1, %s4
  %s7 = scalar_select 0, %s6, %s4
  $region1: #{tpu_custom_call.1} parent=0
    #allocation2 [shape = 'u8[8192]{0}', space=vmem, size = 0x2000, scoped, tag = 'input window, operand 0']
    #allocation3 [shape = 's32[2]{0}', space=sflag, size = 0x8, scoped, tag = 'scoped memory for tpu_custom_call.1']
    #allocation4 [shape = 's32[2]{0}', space=sflag, size = 0x8, scoped, tag = 'scoped memory for tpu_custom_call.1']
    #allocation5 [shape = 'u8[16384]{0}', space=vmem, size = 0x4000, scoped, tag = 'input window, operand 1, single buffered']
    #allocation6 [shape = 's32[1]{0}', space=sflag, size = 0x4, scoped, tag = 'scoped memory for tpu_custom_call.1']
    #allocation7 [shape = 'u8[8192]{0}', space=vmem, size = 0x2000, scoped, tag = 'output window, operand 0']
    %8 = vsyncpa [#allocation3], 0
    %s9 = scalar_lea.sflag [#allocation3], 1
    %10 = vsyncpa %s9, 0
    %11 = vsyncpa [#allocation6], 0
    %12 = vsyncpa [#allocation4], 0
    %s13 = scalar_lea.sflag [#allocation4], 1
    %14 = vsyncpa %s13, 0
    loop: start=0, step=1, limit=4
    $region2: #{tpu_custom_call.1} parent=1 // loop_pre_header
      _
    $region3: #{tpu_custom_call.1} parent=1 // loop_header
      %s16 = sphi 0, %s20
      %p17 = scmp.ge.s32.totalorder %s16, 4
      %s26 = sphi 0, %s28
      %s29 = sphi 0, %s26
      %s30 = sphi 0, %s29
      %s46 = sphi 0, %s30
      %s50 = sphi 0, %s50
      %s52 = sphi 0, %s50
      %s53 = sphi 0, %s52
      %s67 = sphi 0, %s53
      %s71 = sphi 0, %s71
      %s73 = sphi 0, %s71
      %s74 = sphi 0, %s73
      %s88 = sphi 0, %s74
      %s94 = sphi 0, %s96
      %s97 = sphi 0, %s94
      %s98 = sphi 0, %s97
      %s114 = sphi 0, %s98
    $region4: #{tpu_custom_call.1} parent=1 // loop_header_branch
      %19 = sbr.rel (%p17) target = $region8
    $region5: #{tpu_custom_call.1} parent=1 // loop_body
      %s21 = ssub.s32 %s16, 1
      %s22 = ssub.s32 %s16, 2
      %s23 = sadd.s32 %s16, 1
      %s24 = ssub.s32 %s16, %s23
      %p25 = scmp.eq.s32.totalorder %s24, 0
      %s27 = sadd.s32 %s26, 1
      %s28 = scalar_select %p25, %s26, %s27
      %p31 = pneg %p25
      %p32 = scmp.eq.s32.totalorder %s16, 1
      %p33 = por %p31, %p32
      %p34 = scmp.ne.s32.totalorder %s26, %s29
      %p35 = scmp.eq.s32.totalorder %s16, 0
      %p36 = por %p34, %p35
      %p37 = scmp.ne.s32.totalorder %s26, %s29
      %p38 = scmp.eq.s32.totalorder %s21, 1
      %p39 = por %p37, %p38
      %p40 = scmp.ne.s32.totalorder %s29, %s30
      %p41 = scmp.eq.s32.totalorder %s21, 0
      %p42 = por %p40, %p41
      %p43 = scmp.ne.s32.totalorder %s29, %s30
      %p44 = scmp.eq.s32.totalorder %s22, 1
      %p45 = por %p43, %p44
      %p47 = scmp.ne.s32.totalorder %s30, %s46
      %p48 = scmp.eq.s32.totalorder %s22, 0
      %p49 = por %p47, %p48
      %s51 = sadd.s32 %s50, 1
      %p54 = scmp.eq.s32.totalorder %s16, 1
      %p55 = scmp.ne.s32.totalorder %s50, %s52
      %p56 = scmp.eq.s32.totalorder %s16, 0
      %p57 = por %p55, %p56
      %p58 = scmp.ne.s32.totalorder %s50, %s52
      %p59 = scmp.eq.s32.totalorder %s21, 1
      %p60 = por %p58, %p59
      %p61 = scmp.ne.s32.totalorder %s52, %s53
      %p62 = scmp.eq.s32.totalorder %s21, 0
      %p63 = por %p61, %p62
      %p64 = scmp.ne.s32.totalorder %s52, %s53
      %p65 = scmp.eq.s32.totalorder %s22, 1
      %p66 = por %p64, %p65
      %p68 = scmp.ne.s32.totalorder %s53, %s67
      %p69 = scmp.eq.s32.totalorder %s22, 0
      %p70 = por %p68, %p69
      %s72 = sadd.s32 %s71, 1
      %p75 = scmp.eq.s32.totalorder %s16, 1
      %p76 = scmp.ne.s32.totalorder %s71, %s73
      %p77 = scmp.eq.s32.totalorder %s16, 0
      %p78 = por %p76, %p77
      %p79 = scmp.ne.s32.totalorder %s71, %s73
      %p80 = scmp.eq.s32.totalorder %s21, 1
      %p81 = por %p79, %p80
      %p82 = scmp.ne.s32.totalorder %s73, %s74
      %p83 = scmp.eq.s32.totalorder %s21, 0
      %p84 = por %p82, %p83
      %p85 = scmp.ne.s32.totalorder %s73, %s74
      %p86 = scmp.eq.s32.totalorder %s22, 1
      %p87 = por %p85, %p86
      %p89 = scmp.ne.s32.totalorder %s74, %s88
      %p90 = scmp.eq.s32.totalorder %s22, 0
      %p91 = por %p89, %p90
      %s92 = ssub.s32 %s16, %s23
      %p93 = scmp.eq.s32.totalorder %s92, 0
      %s95 = sadd.s32 %s94, 1
      %s96 = scalar_select %p93, %s94, %s95
      %p99 = pneg %p93
      %p100 = scmp.eq.s32.totalorder %s16, 1
      %p101 = por %p99, %p100
      %p102 = scmp.ne.s32.totalorder %s94, %s97
      %p103 = scmp.eq.s32.totalorder %s16, 0
      %p104 = por %p102, %p103
      %p105 = scmp.ne.s32.totalorder %s94, %s97
      %p106 = scmp.eq.s32.totalorder %s21, 1
      %p107 = por %p105, %p106
      %p108 = scmp.ne.s32.totalorder %s97, %s98
      %p109 = scmp.eq.s32.totalorder %s21, 0
      %p110 = por %p108, %p109
      %p111 = scmp.ne.s32.totalorder %s97, %s98
      %p112 = scmp.eq.s32.totalorder %s22, 1
      %p113 = por %p111, %p112
      %p115 = scmp.ne.s32.totalorder %s98, %s114
      %p116 = scmp.eq.s32.totalorder %s22, 0
      %p117 = por %p115, %p116
      %p118 = scmp.le.s32.totalorder 1, %s16
      %p119 = scmp.lt.s32.totalorder %s16, 3
      %p120 = pnand %p118, %p119
      %p121 = pneg %p120
      // Predicated region
      $region9: #{tpu_custom_call.1} parent=5 // pred_check
        _
      $region10: #{tpu_custom_call.1} parent=5 // pred_check_branch
        %123 = sbr.rel (%p120) target = $region12
      $region11: #{tpu_custom_call.1} parent=5 // pred_region
        %s124 = ssub.s32 %s16, 1
        // Predicated region
        $region13: #{tpu_custom_call.1} parent=11 // pred_check
          %p125 = pneg %p63
        $region14: #{tpu_custom_call.1} parent=11 // pred_check_branch
          %127 = sbr.rel (%p125) target = $region16
        $region15: #{tpu_custom_call.1} parent=11 // pred_region
          %129 = vsyncadd [#allocation6], 0
          %s130 = sshll.u32 %s1, 4
          %s131 = int_to_ptr.hbm [resolvable:$true] %s130
          %s132 = sshll.u32 [#allocation5], 4
          %s133 = int_to_ptr.vmem [resolvable:$true] %s132
          %138 = dma.hbm_to_vmem [thread:$0]  %s131, 512, %s133, [#allocation6], 128, 128, 8
        $region16: #{tpu_custom_call.1} parent=11 // pred_fallthru
          _
        // Predicated region
        $region17: #{tpu_custom_call.1} parent=11 // pred_check
          %p139 = pneg %p84
        $region18: #{tpu_custom_call.1} parent=11 // pred_check_branch
          %141 = sbr.rel (%p139) target = $region20
        $region19: #{tpu_custom_call.1} parent=11 // pred_region
          _
        $region20: #{tpu_custom_call.1} parent=11 // pred_fallthru
          _
      $region12: #{tpu_custom_call.1} parent=5 // pred_fallthru
        _
      %p142 = scmp.lt.s32.totalorder %s16, 2
      // Predicated region
      $region21: #{tpu_custom_call.1} parent=5 // pred_check
        %p143 = pneg %p142
      $region22: #{tpu_custom_call.1} parent=5 // pred_check_branch
        %145 = sbr.rel (%p143) target = $region24
      $region23: #{tpu_custom_call.1} parent=5 // pred_region
        // Predicated region
        $region25: #{tpu_custom_call.1} parent=23 // pred_check
          %p146 = pneg %p36
        $region26: #{tpu_custom_call.1} parent=23 // pred_check_branch
          %148 = sbr.rel (%p146) target = $region28
        $region27: #{tpu_custom_call.1} parent=23 // pred_region
          %s149 = sand.u32 %s26, 1
          %s150 = scalar_lea.sflag [#allocation3], %s149
          %s151 = sand.u32 %s26, 1
          %s152 = smul.addr %s151, 8
          %s153 = scalar_lea.vmem [#allocation2], %s152
          %155 = vsyncadd %s150, 0
          %s156 = smul.addr %s16, 8
          %s157 = scalar_lea.hbm %s0, %s156
          %s159 = sshll.u32 %s157, 4
          %s160 = int_to_ptr.hbm [resolvable:$true] %s159
          %s161 = sshll.u32 %s153, 4
          %s162 = int_to_ptr.vmem [resolvable:$true] %s161
          %164 = dma.hbm_to_vmem [thread:$0]  %s160, 128, %s162, %s150
        $region28: #{tpu_custom_call.1} parent=23 // pred_fallthru
          _
      $region24: #{tpu_custom_call.1} parent=5 // pred_fallthru
        _
      %p165 = scmp.le.s32.totalorder 1, %s16
      %p166 = scmp.lt.s32.totalorder %s16, 3
      %p167 = pnand %p165, %p166
      %p168 = pneg %p167
      // Predicated region
      $region29: #{tpu_custom_call.1} parent=5 // pred_check
        _
      $region30: #{tpu_custom_call.1} parent=5 // pred_check_branch
        %170 = sbr.rel (%p167) target = $region32
      $region31: #{tpu_custom_call.1} parent=5 // pred_region
        %s171 = ssub.s32 %s16, 1
        %s172 = sand.u32 %s29, 1
        %s173 = scalar_lea.sflag [#allocation3], %s172
        %s174 = sand.u32 %s29, 1
        %s175 = smul.addr %s174, 8
        %s176 = scalar_lea.vmem [#allocation2], %s175
        // Predicated region
        $region33: #{tpu_custom_call.1} parent=31 // pred_check
          %p177 = pneg %p42
        $region34: #{tpu_custom_call.1} parent=31 // pred_check_branch
          %179 = sbr.rel (%p177) target = $region36
        $region35: #{tpu_custom_call.1} parent=31 // pred_region
          %181 = dma.done %s173, 128
        $region36: #{tpu_custom_call.1} parent=31 // pred_fallthru
          _
        // Predicated region
        $region37: #{tpu_custom_call.1} parent=31 // pred_check
          %p182 = pneg %p63
        $region38: #{tpu_custom_call.1} parent=31 // pred_check_branch
          %184 = sbr.rel (%p182) target = $region40
        $region39: #{tpu_custom_call.1} parent=31 // pred_region
          %186 = dma.done [#allocation6], 512
        $region40: #{tpu_custom_call.1} parent=31 // pred_fallthru
          _
        %s187 = sand.u32 %s29, 1
        %s188 = scalar_lea.sflag [#allocation3], %s187
        %s189 = sand.u32 %s29, 1
        %s190 = smul.addr %s189, 8
        %s191 = scalar_lea.vmem [#allocation2], %s190
        %p192 = pneg %p42
        %p193 = pneg %p39
        %p194 = pneg %p63
        %p195 = pneg %p60
        %p196 = pneg %p84
        %p197 = pneg %p81
        %p198 = pneg %p110
        %p199 = pneg %p107
        %s200 = sand.u32 %s97, 1
        %s201 = scalar_lea.sflag [#allocation4], %s200
        %s202 = sand.u32 %s97, 1
        %s203 = smul.addr %s202, 8
        %s204 = scalar_lea.vmem [#allocation7], %s203
        %v205 = vld [vmem:[%s176] sm:$0xff]
        %v206 = vld [vmem:[#allocation5] sm:$0xff]
        %v207 = vld [vmem:[#allocation5 + $0x8] sm:$0xff]
        %v208 = vld [vmem:[#allocation5 + $0x10] sm:$0xff]
        %v209 = vld [vmem:[#allocation5 + $0x18] sm:$0xff]
        %v210 = vld [vmem:[%s2] sm:$0x1]
        %v212 = vperm.slane %v210, 0
        %vm214 = vcmask 261120
        %v216 = vsel %vm214, %v205, 0
        %218 = vmatpush.msra.mxu0 0.0
        %219 = vmatpush.msra.mxu0 0.0
        %220 = vmatpush.msra.mxu0 0.0
        %221 = vmatpush.msra.mxu0 0.0
        %222 = vmatpush.msra.mxu0 0.0
        %223 = vmatpush.msra.mxu0 0.0
        %224 = vmatpush.msra.mxu0 0.0
        %225 = vmatpush.msra.mxu0 0.0
        %226 = vmatpush.msra.mxu0 0.0
        %227 = vmatpush.msra.mxu0 0.0
        %228 = vmatpush.msra.mxu0 0.0
        %229 = vmatpush.msra.mxu0 0.0
        %230 = vmatpush.msra.mxu0 %v209
        %231 = vmatpush.msra.mxu0 %v208
        %232 = vmatpush.msra.mxu0 %v207
        %233 = vmatpush.msra.mxu0 %v206
        %234 = vmatmul.f32.gmra.mxu0 %v216
        %v235 = vpop.f32.mrf.mxu0
        %v236 = vadd.f32 %v212, %v235
        %237 = vdwg.mxu0
        %vm238 = vcmask 785408
        %239 = vst.msk [vmem:[%s204] sm:$0xff] %vm238, %v236
        %s240 = sand.u32 %s97, 1
        %s241 = scalar_lea.sflag [#allocation4], %s240
        %s242 = sand.u32 %s97, 1
        %s243 = smul.addr %s242, 8
        %s244 = scalar_lea.vmem [#allocation7], %s243
        // Predicated region
        $region41: #{tpu_custom_call.1} parent=31 // pred_check
          %p245 = pneg %p107
        $region42: #{tpu_custom_call.1} parent=31 // pred_check_branch
          %247 = sbr.rel (%p245) target = $region44
        $region43: #{tpu_custom_call.1} parent=31 // pred_region
          %249 = vsyncadd %s241, 0
          %s250 = smul.addr %s21, 8
          %s251 = scalar_lea.hbm %s3, %s250
          %s253 = sshll.u32 %s244, 4
          %s254 = int_to_ptr.vmem [resolvable:$true] %s253
          %s255 = sshll.u32 %s251, 4
          %s256 = int_to_ptr.hbm [resolvable:$true] %s255
          %258 = dma.vmem_to_hbm [thread:$0]  %s254, 128, %s256, %s241
        $region44: #{tpu_custom_call.1} parent=31 // pred_fallthru
          _
      $region32: #{tpu_custom_call.1} parent=5 // pred_fallthru
        _
      %p259 = scmp.le.s32.totalorder 2, %s16
      // Predicated region
      $region45: #{tpu_custom_call.1} parent=5 // pred_check
        %p260 = pneg %p259
      $region46: #{tpu_custom_call.1} parent=5 // pred_check_branch
        %262 = sbr.rel (%p260) target = $region48
      $region47: #{tpu_custom_call.1} parent=5 // pred_region
        %s263 = ssub.s32 %s16, 2
        // Predicated region
        $region49: #{tpu_custom_call.1} parent=47 // pred_check
          %p264 = pneg %p113
        $region50: #{tpu_custom_call.1} parent=47 // pred_check_branch
          %266 = sbr.rel (%p264) target = $region52
        $region51: #{tpu_custom_call.1} parent=47 // pred_region
          %s267 = sand.u32 %s98, 1
          %s268 = scalar_lea.sflag [#allocation4], %s267
          %s269 = sand.u32 %s98, 1
          %s270 = smul.addr %s269, 8
          %s271 = scalar_lea.vmem [#allocation7], %s270
          %273 = dma.done %s268, 128
        $region52: #{tpu_custom_call.1} parent=47 // pred_fallthru
          _
      $region48: #{tpu_custom_call.1} parent=5 // pred_fallthru
        _
    $region6: #{tpu_custom_call.1} parent=1 // loop_footer
      %s20 = sadd.s32 1, %s16
    $region7: #{tpu_custom_call.1} parent=1 // loop_footer_branch
      %15 = sbr.rel target = $region3
    $region8: #{tpu_custom_call.1} parent=1 // loop_exit
      _
    %274 = vsyncpa [#allocation3], 1
    %s275 = scalar_lea.sflag [#allocation3], 1
    %276 = vsyncpa %s275, 1
    %277 = vsyncpa [#allocation6], 1
    %278 = vsyncpa [#allocation4], 1
    %s279 = scalar_lea.sflag [#allocation4], 1
    %280 = vsyncpa %s279, 1

</llo_original>
